<compile_context>
chip_gen: v7x
topology: tpu7x:2x2x1
jax: 0.10.0
libtpu: 0.0.40
codegen_flags: <defaults>
</compile_context>

<pallas_src>
import functools

import jax
import jax.numpy as jnp
from jax.experimental import pallas as pl
from jax.experimental.pallas import tpu as pltpu


# -----------------------------------------------------------------------------
# Stage 1: LSH encoding (f32 MXU matmul + VPU compare; runs once per side).
# -----------------------------------------------------------------------------

def _encode_rows_kernel(emb_ref, rt_ref, codes_ref, sums_ref):
    # emb_ref: (tr, K) f32; rt_ref: (K, d) f32 (r pre-transposed, resident).
    proj = jnp.dot(emb_ref[...], rt_ref[...],
                   preferred_element_type=jnp.float32)          # (tr, d)
    codes = (proj > 0).astype(jnp.float32)
    codes_ref[...] = codes.astype(codes_ref.dtype)              # (tr, d)
    sums_ref[...] = jnp.sum(codes, axis=-1, keepdims=True)      # (tr, 1) lane reduce


def _encode_cols_kernel(r_ref, embt_ref, codes_ref, sums_ref):
    # r_ref: (d, K) f32 (resident); embt_ref: (K, tc) f32 (emb2 pre-transposed).
    proj_t = jnp.dot(r_ref[...], embt_ref[...],
                     preferred_element_type=jnp.float32)        # (d, tc)
    codes = (proj_t > 0).astype(jnp.float32)
    codes_ref[...] = codes.astype(codes_ref.dtype)              # (d, tc)
    # Column popcount: route the d-row (sublane) reduction through the mostly
    # idle MXU (ones-row matmul) instead of a cross-sublane XLU reduce.
    ones = jnp.ones((8, codes.shape[0]), jnp.float32)
    colsum = jnp.dot(ones, codes, preferred_element_type=jnp.float32)  # (8, tc)
    sums_ref[...] = colsum[0:1, :]                              # (1, tc)


# -----------------------------------------------------------------------------
# Stage 2: pairwise hamming + cos (one MXU matmul per output tile).
# -----------------------------------------------------------------------------

def _cos_0_pi(x):
    """cos(x) for x exactly in [0, pi], via 1 - 2*sin^2(x/2).

    sin on [0, pi/2] uses the odd Taylor series through y^11 (max abs error
    ~6e-8 -> cos error <~2.5e-7), so accuracy stays far below the comparison
    tolerance while costing ~10 VPU ops instead of a range-reduced jnp.cos.
    """
    y = 0.5 * x
    z = y * y
    p = -1.0 / 39916800.0
    p = p * z + (1.0 / 362880.0)
    p = p * z + (-1.0 / 5040.0)
    p = p * z + (1.0 / 120.0)
    p = p * z + (-1.0 / 6.0)
    p = p * z + 1.0
    s = y * p
    return 1.0 - 2.0 * (s * s)


def _distance_kernel(c1_ref, c2t_ref, s1_ref, s2_ref, o_ref, *, scale):
    # c1_ref: (tm, d), c2t_ref: (d, tn) -- 0/1 codes in int8 or bf16.
    acc = jnp.int32 if c1_ref.dtype == jnp.int8 else jnp.float32
    dot = jnp.dot(c1_ref[...], c2t_ref[...],
                  preferred_element_type=acc).astype(jnp.float32)   # exact
    ham = s1_ref[...] + s2_ref[...] - 2.0 * dot        # integer-valued, [0, d]
    o_ref[...] = _cos_0_pi(scale * ham)


# -----------------------------------------------------------------------------
# Per-chip tuning + wrapper
# -----------------------------------------------------------------------------

def _chip_profile():
    """Returns (code_dtype, vmem_limit_bytes, tile_cap, step_budget_bytes)."""
    try:
        kind = jax.devices()[0].device_kind.lower()
    except Exception:
        kind = ""
    if "v7" in kind:
        # TODO(synk): use fp8 e4m3 codes on v7x (no int MXU path there); bf16
        # kept as the known-good exact fallback.
        return jnp.bfloat16, 48 << 20, 1024, 24 << 20
    if ("v5" in kind) or ("v6" in kind):
        return jnp.int8, 64 << 20, 1024, 40 << 20
    # Unknown / older chip: conservative defaults (bf16, default scoped VMEM).
    return jnp.bfloat16, None, 512, 10 << 20


def _fit_budget(tm, tn, d, code_bytes, budget, tm_fixed, tn_fixed):
    """Shrink cap-sized stage-2 tiles until the per-step footprint fits."""
    def footprint(a, b):
        # double-buffered code tiles + double-buffered f32 output tile
        return 2 * (a + b) * d * code_bytes + 2 * a * b * 4

    while footprint(tm, tn) > budget:
        if not tn_fixed and tn >= tm and tn > 256:
            tn //= 2
        elif not tm_fixed and tm > 256:
            tm //= 2
        elif not tn_fixed and tn > 256:
            tn //= 2
        else:
            # TODO(synk): add a k grid axis over d (accumulator + pl.when) for
            # very large num_bits instead of keeping d fully resident per tile.
            break
    return tm, tn


def _lsh_forward_impl(emb1, emb2, r, pi_val, code_dtype, tm, tn, tr, tc,
                      vmem_limit):
    M, K = emb1.shape
    N, _ = emb2.shape
    d, _ = r.shape
    scale = float(pi_val) / float(d)            # compile-time constant

    f32 = jnp.float32
    emb1 = emb1.astype(f32)
    emb2t = emb2.astype(f32).T                  # (K, N): plain-matmul encode
    rt = r.astype(f32).T                        # (K, d): plain-matmul encode
    r = r.astype(f32)

    def cparams(sem):
        kw = dict(dimension_semantics=sem)
        if vmem_limit is not None:
            kw["vmem_limit_bytes"] = int(vmem_limit)
        return pltpu.CompilerParams(**kw)

    # ---- stage 1a: codes1 (M, d) + row popcounts (M, 1) f32 ----
    codes1, s1 = pl.pallas_call(
        _encode_rows_kernel,
        out_shape=(jax.ShapeDtypeStruct((M, d), code_dtype),
                   jax.ShapeDtypeStruct((M, 1), f32)),
        grid_spec=pltpu.PrefetchScalarGridSpec(
            num_scalar_prefetch=0,
            grid=(pl.cdiv(M, tr),),
            in_specs=[
                pl.BlockSpec((tr, K), lambda i: (i, 0)),
                pl.BlockSpec((K, d), lambda i: (0, 0)),      # resident
            ],
            out_specs=(
                pl.BlockSpec((tr, d), lambda i: (i, 0)),
                pl.BlockSpec((tr, 1), lambda i: (i, 0)),
            ),
        ),
        compiler_params=cparams(("parallel",)),
    )(emb1, rt)

    # ---- stage 1b: codes2 pre-transposed (d, N) + col popcounts (1, N) ----
    codes2t, s2 = pl.pallas_call(
        _encode_cols_kernel,
        out_shape=(jax.ShapeDtypeStruct((d, N), code_dtype),
                   jax.ShapeDtypeStruct((1, N), f32)),
        grid_spec=pltpu.PrefetchScalarGridSpec(
            num_scalar_prefetch=0,
            grid=(pl.cdiv(N, tc),),
            in_specs=[
                pl.BlockSpec((d, K), lambda j: (0, 0)),      # resident
                pl.BlockSpec((K, tc), lambda j: (0, j)),
            ],
            out_specs=(
                pl.BlockSpec((d, tc), lambda j: (0, j)),
                pl.BlockSpec((1, tc), lambda j: (0, j)),
            ),
        ),
        compiler_params=cparams(("parallel",)),
    )(r, emb2t)

    # ---- stage 2: tiled distance matmul + bounded-range cos epilogue ----
    # Grid order: the LARGER code matrix is indexed by the OUTER grid axis so
    # Pallas fetches it exactly once; the smaller one is re-streamed.
    if M >= N:
        grid = (pl.cdiv(M, tm), pl.cdiv(N, tn))
        im_c1 = lambda i, j: (i, 0)
        im_c2 = lambda i, j: (0, j)
        im_s1 = lambda i, j: (i, 0)
        im_s2 = lambda i, j: (0, j)
        im_o = lambda i, j: (i, j)
    else:
        grid = (pl.cdiv(N, tn), pl.cdiv(M, tm))
        im_c1 = lambda j, i: (i, 0)
        im_c2 = lambda j, i: (0, j)
        im_s1 = lambda j, i: (i, 0)
        im_s2 = lambda j, i: (0, j)
        im_o = lambda j, i: (i, j)

    out = pl.pallas_call(
        functools.partial(_distance_kernel, scale=scale),
        out_shape=jax.ShapeDtypeStruct((M, N), f32),
        grid_spec=pltpu.PrefetchScalarGridSpec(
            num_scalar_prefetch=0,
            grid=grid,
            in_specs=[
                pl.BlockSpec((tm, d), im_c1),
                pl.BlockSpec((d, tn), im_c2),
                pl.BlockSpec((tm, 1), im_s1),
                pl.BlockSpec((1, tn), im_s2),
            ],
            out_specs=pl.BlockSpec((tm, tn), im_o),
        ),
        compiler_params=cparams(("parallel", "parallel")),
    )(codes1, codes2t, s1, s2)
    return out


def lsh_forward(emb1, emb2, r, pi_val, *, tm=None, tn=None, tr=None, tc=None,
                code_dtype=None):
    """Pallas implementation of LshModule.forward for 2-D inputs.

    emb1: (M, 128) f32, emb2: (N, 128) f32, r: (num_bits, 128) f32.
    Returns cos(pi/num_bits * hamming(codes1, codes2)) of shape (M, N) f32.
    """
    M, K = emb1.shape
    N, K2 = emb2.shape
    d, K3 = r.shape
    assert K == K2 == K3, "feature dims must match"

    prof_dtype, vmem_limit, cap, budget = _chip_profile()
    if code_dtype is None:
        code_dtype = prof_dtype

    tm_fixed, tn_fixed = tm is not None, tn is not None
    tm = min(M, cap) if tm is None else tm
    tn = min(N, cap) if tn is None else tn
    tr = min(M, cap) if tr is None else tr
    tc = min(N, cap) if tc is None else tc
    tm_fixed = tm_fixed or tm == M
    tn_fixed = tn_fixed or tn == N

    code_bytes = jnp.dtype(code_dtype).itemsize
    tm, tn = _fit_budget(tm, tn, d, code_bytes, budget, tm_fixed, tn_fixed)

    try:
        return _lsh_forward_impl(emb1, emb2, r, pi_val, code_dtype,
                                 tm, tn, tr, tc, vmem_limit)
    except Exception:
        if jnp.dtype(code_dtype) == jnp.dtype(jnp.bfloat16):
            raise
        # int8 code path failed to lower on this chip; fall back to the
        # known-good bf16 code path (still exact for 0/1 codes).
        return _lsh_forward_impl(emb1, emb2, r, pi_val, jnp.bfloat16,
                                 tm, tn, tr, tc, vmem_limit)


# -----------------------------------------------------------------------------
# Reference + demo
# -----------------------------------------------------------------------------

def _reference(emb1, emb2, r, pi_val):
    hp = jax.lax.Precision.HIGHEST
    c1 = (jnp.matmul(emb1, r.T, precision=hp) > 0).astype(jnp.float32)
    c2 = (jnp.matmul(emb2, r.T, precision=hp) > 0).astype(jnp.float32)
    ham = jnp.sum(c1[:, None, :] != c2[None, :, :], axis=-1).astype(jnp.float32)
    return jnp.cos(pi_val / r.shape[0] * ham)


if __name__ == "__main__":
    key = jax.random.PRNGKey(0)
    k_r, k1, k2 = jax.random.split(key, 3)

    num_bits = 256            # module default is 1024; kept small for the demo
    mu, sigma = 0.0, 0.1
    M, N, K = 256, 384, 128   # emb feature dim is fixed at 128 by the module

    r = jax.random.normal(k_r, (num_bits, K), dtype=jnp.float32) * sigma + mu
    pi_val = float(jnp.pi)

    emb1 = jax.random.normal(k1, (M, K), dtype=jnp.float32)
    emb2 = jax.random.normal(k2, (N, K), dtype=jnp.float32)

    # Small tiles so the demo exercises a real multi-step output grid.
    out = lsh_forward(emb1, emb2, r, pi_val, tm=128, tn=128, tr=128, tc=128)
    out = jax.block_until_ready(out)
    assert out.shape == (M, N)

    ref = _reference(emb1, emb2, r, pi_val)
    if not bool(jnp.allclose(out, ref, atol=1e-5)):
        # Borderline |proj| ~ 0 sign decisions may differ between the kernel's
        # MXU matmul and the XLA reference; tolerate a couple of flipped bits.
        ham_k = jnp.round(jnp.arccos(jnp.clip(out, -1.0, 1.0)) * num_bits / pi_val)
        ham_r = jnp.round(jnp.arccos(jnp.clip(ref, -1.0, 1.0)) * num_bits / pi_val)
        assert float(jnp.max(jnp.abs(ham_k - ham_r))) <= 2.0, "mismatch vs reference"

    print("KERNEL_OK")
</pallas_src>

<mosaic_0001>
module attributes {stable_mosaic.version = 11 : i64} {
  func.func @_encode_rows_kernel(%arg0: i32, %arg1: memref<128x128xf32, #tpu.memory_space<vmem>>, %arg2: memref<128x256xf32, #tpu.memory_space<vmem>>, %arg3: memref<128x256xbf16, #tpu.memory_space<vmem>>, %arg4: memref<128x1xf32, #tpu.memory_space<vmem>>) attributes {dimension_semantics = [#tpu.dimension_semantics<parallel>], iteration_bounds = array<i64: 2>, scalar_prefetch = 0 : i64, scratch_operands = 0 : i64, tpu.core_type = #tpu.core_type<tc>, window_params = [{transform_indices = @transform_0, window_bounds = array<i64: 128, 128>}, {pipeline_mode = #tpu.pipeline_mode<synchronous>, transform_indices = @transform_1, window_bounds = array<i64: 128, 256>}, {transform_indices = @transform_2, window_bounds = array<i64: 128, 256>}, {transform_indices = @transform_3, window_bounds = array<i64: 128, 1>}]} {
    %c0 = arith.constant 0 : index
    %c0_0 = arith.constant 0 : index
    %0 = vector.load %arg1[%c0, %c0_0] : memref<128x128xf32, #tpu.memory_space<vmem>>, vector<128x128xf32>
    %c0_1 = arith.constant 0 : index
    %c0_2 = arith.constant 0 : index
    %1 = vector.load %arg2[%c0_1, %c0_2] : memref<128x256xf32, #tpu.memory_space<vmem>>, vector<128x256xf32>
    %cst = arith.constant dense<0.000000e+00> : vector<128x256xf32>
    %2 = tpu.matmul %0, %1, %cst {dimension_numbers = #tpu.dot_dimension_numbers<[1], [0], [0], [1], [0, 0, 1, 1], [], []>} : vector<128x128xf32>, vector<128x256xf32>, vector<128x256xf32> -> vector<128x256xf32>
    %cst_3 = arith.constant 0.000000e+00 : f32
    %3 = vector.broadcast %cst_3 : f32 to vector<128x256xf32>
    %4 = arith.cmpf ogt, %2, %3 : vector<128x256xf32>
    %5 = arith.extui %4 : vector<128x256xi1> to vector<128x256xi32>
    %6 = arith.sitofp %5 : vector<128x256xi32> to vector<128x256xf32>
    %7 = arith.truncf %6 : vector<128x256xf32> to vector<128x256xbf16>
    %c0_4 = arith.constant 0 : index
    %c0_5 = arith.constant 0 : index
    %8 = vector.load %arg3[%c0_4, %c0_5] : memref<128x256xbf16, #tpu.memory_space<vmem>>, vector<128x256xbf16>
    tpu.vector_store %arg3[%c0_4, %c0_5], %7 {strides = array<i32>} : memref<128x256xbf16, #tpu.memory_space<vmem>>, vector<128x256xbf16>,
    %cst_6 = arith.constant dense<0.000000e+00> : vector<128xf32>
    %9 = vector.multi_reduction <add>, %6, %cst_6 [1] : vector<128x256xf32> to vector<128xf32>
    %10 = vector.shape_cast %9 : vector<128xf32> to vector<128x1xf32>
    %c0_7 = arith.constant 0 : index
    %c0_8 = arith.constant 0 : index
    %11 = vector.load %arg4[%c0_7, %c0_8] : memref<128x1xf32, #tpu.memory_space<vmem>>, vector<128x1xf32>
    tpu.vector_store %arg4[%c0_7, %c0_8], %10 {strides = array<i32>} : memref<128x1xf32, #tpu.memory_space<vmem>>, vector<128x1xf32>,
    return
  }
  func.func @transform_0(%arg0: i32) -> (i32, i32) {
    %c0_i32 = arith.constant 0 : i32
    %c0_i32_0 = arith.constant 0 : i32
    return %arg0, %c0_i32 : i32, i32
  }
  func.func @transform_1(%arg0: i32) -> (i32, i32) {
    %c0_i32 = arith.constant 0 : i32
    %c0_i32_0 = arith.constant 0 : i32
    %c0_i32_1 = arith.constant 0 : i32
    return %c0_i32, %c0_i32_0 : i32, i32
  }
  func.func @transform_2(%arg0: i32) -> (i32, i32) {
    %c0_i32 = arith.constant 0 : i32
    %c0_i32_0 = arith.constant 0 : i32
    return %arg0, %c0_i32 : i32, i32
  }
  func.func @transform_3(%arg0: i32) -> (i32, i32) {
    %c0_i32 = arith.constant 0 : i32
    %c0_i32_0 = arith.constant 0 : i32
    return %arg0, %c0_i32 : i32, i32
  }
}

</mosaic_0001>

<llo_original>
// kernel: tpu_custom_call.1
$region0: #{tpu_custom_call.1}
  #allocation0 [shape = 'u32[]', space=smem, size = 0x4, offset = 0x4, fixed_abs, tag = 'smem constant byte address 0x4 - core index']
  #allocation1 [shape = 'u32[144,128]{1,0:T(1,128)}', space=vmem, size = 0x12000, scoped, tag = 'internal scratch']
  %s0 = inlined_call_operand.hbm [shape: f32[256,128], index: 0, kind: input, shape index: {}]
  %s1 = inlined_call_operand.hbm [shape: f32[128,256], index: 1, kind: input, shape index: {}]
  %s2 = inlined_call_operand.hbm [shape: bf16[256,256], index: 2, kind: output, shape index: {0}]
  %s3 = inlined_call_operand.vmem [shape: f32[256,1], index: 3, kind: output, shape index: {1}]
  %4 = xla_tuple %s2, %s3
  %s5 = sld [smem:[#allocation0]]
  $region57: #{tpu_custom_call.1} parent=0
    _
  %s7 = ssub.s32 1, %s5
  %s8 = scalar_select 0, %s7, %s5
  $region1: #{tpu_custom_call.1} parent=0
    #allocation2 [shape = 'u8[131072]{0}', space=vmem, size = 0x20000, scoped, tag = 'input window, operand 0']
    #allocation3 [shape = 's32[2]{0}', space=sflag, size = 0x8, scoped, tag = 'scoped memory for tpu_custom_call.1']
    #allocation4 [shape = 's32[2]{0}', space=sflag, size = 0x8, scoped, tag = 'scoped memory for tpu_custom_call.1']
    #allocation5 [shape = 'u8[131072]{0}', space=vmem, size = 0x20000, scoped, tag = 'input window, operand 1, single buffered']
    #allocation6 [shape = 's32[1]{0}', space=sflag, size = 0x4, scoped, tag = 'scoped memory for tpu_custom_call.1']
    #allocation7 [shape = 'u8[131072]{0}', space=vmem, size = 0x20000, scoped, tag = 'output window, operand 0']
    %9 = vsyncpa [#allocation3], 0
    %s10 = scalar_lea.sflag [#allocation3], 1
    %11 = vsyncpa %s10, 0
    %12 = vsyncpa [#allocation6], 0
    %13 = vsyncpa [#allocation4], 0
    %s14 = scalar_lea.sflag [#allocation4], 1
    %15 = vsyncpa %s14, 0
    loop: start=0, step=1, limit=4
    $region2: #{tpu_custom_call.1} parent=1 // loop_pre_header
      _
    $region3: #{tpu_custom_call.1} parent=1 // loop_header
      %s17 = sphi 0, %s21
      %p18 = scmp.ge.s32.totalorder %s17, 4
      %s27 = sphi 0, %s29
      %s30 = sphi 0, %s27
      %s31 = sphi 0, %s30
      %s47 = sphi 0, %s31
      %s51 = sphi 0, %s51
      %s53 = sphi 0, %s51
      %s54 = sphi 0, %s53
      %s68 = sphi 0, %s54
      %s74 = sphi 0, %s76
      %s77 = sphi 0, %s74
      %s78 = sphi 0, %s77
      %s94 = sphi 0, %s78
      %s100 = sphi 0, %s102
      %s103 = sphi 0, %s100
      %s104 = sphi 0, %s103
      %s120 = sphi 0, %s104
    $region4: #{tpu_custom_call.1} parent=1 // loop_header_branch
      %20 = sbr.rel (%p18) target = $region8
    $region5: #{tpu_custom_call.1} parent=1 // loop_body
      %s22 = ssub.s32 %s17, 1
      %s23 = ssub.s32 %s17, 2
      %s24 = sadd.s32 %s17, 1
      %s25 = ssub.s32 %s17, %s24
      %p26 = scmp.eq.s32.totalorder %s25, 0
      %s28 = sadd.s32 %s27, 1
      %s29 = scalar_select %p26, %s27, %s28
      %p32 = pneg %p26
      %p33 = scmp.eq.s32.totalorder %s17, 1
      %p34 = por %p32, %p33
      %p35 = scmp.ne.s32.totalorder %s27, %s30
      %p36 = scmp.eq.s32.totalorder %s17, 0
      %p37 = por %p35, %p36
      %p38 = scmp.ne.s32.totalorder %s27, %s30
      %p39 = scmp.eq.s32.totalorder %s22, 1
      %p40 = por %p38, %p39
      %p41 = scmp.ne.s32.totalorder %s30, %s31
      %p42 = scmp.eq.s32.totalorder %s22, 0
      %p43 = por %p41, %p42
      %p44 = scmp.ne.s32.totalorder %s30, %s31
      %p45 = scmp.eq.s32.totalorder %s23, 1
      %p46 = por %p44, %p45
      %p48 = scmp.ne.s32.totalorder %s31, %s47
      %p49 = scmp.eq.s32.totalorder %s23, 0
      %p50 = por %p48, %p49
      %s52 = sadd.s32 %s51, 1
      %p55 = scmp.eq.s32.totalorder %s17, 1
      %p56 = scmp.ne.s32.totalorder %s51, %s53
      %p57 = scmp.eq.s32.totalorder %s17, 0
      %p58 = por %p56, %p57
      %p59 = scmp.ne.s32.totalorder %s51, %s53
      %p60 = scmp.eq.s32.totalorder %s22, 1
      %p61 = por %p59, %p60
      %p62 = scmp.ne.s32.totalorder %s53, %s54
      %p63 = scmp.eq.s32.totalorder %s22, 0
      %p64 = por %p62, %p63
      %p65 = scmp.ne.s32.totalorder %s53, %s54
      %p66 = scmp.eq.s32.totalorder %s23, 1
      %p67 = por %p65, %p66
      %p69 = scmp.ne.s32.totalorder %s54, %s68
      %p70 = scmp.eq.s32.totalorder %s23, 0
      %p71 = por %p69, %p70
      %s72 = ssub.s32 %s17, %s24
      %p73 = scmp.eq.s32.totalorder %s72, 0
      %s75 = sadd.s32 %s74, 1
      %s76 = scalar_select %p73, %s74, %s75
      %p79 = pneg %p73
      %p80 = scmp.eq.s32.totalorder %s17, 1
      %p81 = por %p79, %p80
      %p82 = scmp.ne.s32.totalorder %s74, %s77
      %p83 = scmp.eq.s32.totalorder %s17, 0
      %p84 = por %p82, %p83
      %p85 = scmp.ne.s32.totalorder %s74, %s77
      %p86 = scmp.eq.s32.totalorder %s22, 1
      %p87 = por %p85, %p86
      %p88 = scmp.ne.s32.totalorder %s77, %s78
      %p89 = scmp.eq.s32.totalorder %s22, 0
      %p90 = por %p88, %p89
      %p91 = scmp.ne.s32.totalorder %s77, %s78
      %p92 = scmp.eq.s32.totalorder %s23, 1
      %p93 = por %p91, %p92
      %p95 = scmp.ne.s32.totalorder %s78, %s94
      %p96 = scmp.eq.s32.totalorder %s23, 0
      %p97 = por %p95, %p96
      %s98 = ssub.s32 %s17, %s24
      %p99 = scmp.eq.s32.totalorder %s98, 0
      %s101 = sadd.s32 %s100, 1
      %s102 = scalar_select %p99, %s100, %s101
      %p105 = pneg %p99
      %p106 = scmp.eq.s32.totalorder %s17, 1
      %p107 = por %p105, %p106
      %p108 = scmp.ne.s32.totalorder %s100, %s103
      %p109 = scmp.eq.s32.totalorder %s17, 0
      %p110 = por %p108, %p109
      %p111 = scmp.ne.s32.totalorder %s100, %s103
      %p112 = scmp.eq.s32.totalorder %s22, 1
      %p113 = por %p111, %p112
      %p114 = scmp.ne.s32.totalorder %s103, %s104
      %p115 = scmp.eq.s32.totalorder %s22, 0
      %p116 = por %p114, %p115
      %p117 = scmp.ne.s32.totalorder %s103, %s104
      %p118 = scmp.eq.s32.totalorder %s23, 1
      %p119 = por %p117, %p118
      %p121 = scmp.ne.s32.totalorder %s104, %s120
      %p122 = scmp.eq.s32.totalorder %s23, 0
      %p123 = por %p121, %p122
      %p124 = scmp.le.s32.totalorder 1, %s17
      %p125 = scmp.lt.s32.totalorder %s17, 3
      %p126 = pnand %p124, %p125
      %p127 = pneg %p126
      // Predicated region
      $region9: #{tpu_custom_call.1} parent=5 // pred_check
        _
      $region10: #{tpu_custom_call.1} parent=5 // pred_check_branch
        %129 = sbr.rel (%p126) target = $region12
      $region11: #{tpu_custom_call.1} parent=5 // pred_region
        %s130 = ssub.s32 %s17, 1
        // Predicated region
        $region13: #{tpu_custom_call.1} parent=11 // pred_check
          %p131 = pneg %p64
        $region14: #{tpu_custom_call.1} parent=11 // pred_check_branch
          %133 = sbr.rel (%p131) target = $region16
        $region15: #{tpu_custom_call.1} parent=11 // pred_region
          %s135 = ssub.s32 4096, 4096
          %136 = vsyncadd [#allocation6], %s135
          %s137 = sshll.u32 [#allocation5], 4
          %s138 = int_to_ptr.vmem [resolvable:$true] %s137
          %143 = dma.hbm_to_vmem [thread:$0]  %s1, 4096, %s138, [#allocation6], 256, 256, 16
        $region16: #{tpu_custom_call.1} parent=11 // pred_fallthru
          _
      $region12: #{tpu_custom_call.1} parent=5 // pred_fallthru
        _
      %p144 = scmp.lt.s32.totalorder %s17, 2
      // Predicated region
      $region17: #{tpu_custom_call.1} parent=5 // pred_check
        %p145 = pneg %p144
      $region18: #{tpu_custom_call.1} parent=5 // pred_check_branch
        %147 = sbr.rel (%p145) target = $region20
      $region19: #{tpu_custom_call.1} parent=5 // pred_region
        // Predicated region
        $region21: #{tpu_custom_call.1} parent=19 // pred_check
          %p148 = pneg %p37
        $region22: #{tpu_custom_call.1} parent=19 // pred_check_branch
          %150 = sbr.rel (%p148) target = $region24
        $region23: #{tpu_custom_call.1} parent=19 // pred_region
          %s151 = sand.u32 %s27, 1
          %s152 = scalar_lea.sflag [#allocation3], %s151
          %s153 = sand.u32 %s27, 1
          %s154 = smul.addr %s153, 128
          %s155 = scalar_lea.vmem [#allocation2], %s154
          %s156 = smul.u32 16, %s17
          %s158 = ssub.s32 2048, 2048
          %159 = vsyncadd %s152, %s158
          %s160 = smul.addr %s156, 128
          %s161 = scalar_lea.hbm %s0, %s160
          %s162 = sshll.u32 %s155, 4
          %s163 = int_to_ptr.vmem [resolvable:$true] %s162
          %168 = dma.hbm_to_vmem [thread:$0]  %s161, 2048, %s163, %s152, 128, 128, 8
        $region24: #{tpu_custom_call.1} parent=19 // pred_fallthru
          _
      $region20: #{tpu_custom_call.1} parent=5 // pred_fallthru
        _
      %p169 = scmp.le.s32.totalorder 1, %s17
      %p170 = scmp.lt.s32.totalorder %s17, 3
      %p171 = pnand %p169, %p170
      %p172 = pneg %p171
      // Predicated region
      $region25: #{tpu_custom_call.1} parent=5 // pred_check
        _
      $region26: #{tpu_custom_call.1} parent=5 // pred_check_branch
        %174 = sbr.rel (%p171) target = $region28
      $region27: #{tpu_custom_call.1} parent=5 // pred_region
        %s175 = ssub.s32 %s17, 1
        %s176 = sand.u32 %s30, 1
        %s177 = scalar_lea.sflag [#allocation3], %s176
        %s178 = sand.u32 %s30, 1
        %s179 = smul.addr %s178, 128
        %s180 = scalar_lea.vmem [#allocation2], %s179
        // Predicated region
        $region29: #{tpu_custom_call.1} parent=27 // pred_check
          %p181 = pneg %p43
        $region30: #{tpu_custom_call.1} parent=27 // pred_check_branch
          %183 = sbr.rel (%p181) target = $region32
        $region31: #{tpu_custom_call.1} parent=27 // pred_region
          %184 = dma.done %s177, 2048
        $region32: #{tpu_custom_call.1} parent=27 // pred_fallthru
          _
        // Predicated region
        $region33: #{tpu_custom_call.1} parent=27 // pred_check
          %p185 = pneg %p64
        $region34: #{tpu_custom_call.1} parent=27 // pred_check_branch
          %187 = sbr.rel (%p185) target = $region36
        $region35: #{tpu_custom_call.1} parent=27 // pred_region
          %188 = dma.done [#allocation6], 4096
        $region36: #{tpu_custom_call.1} parent=27 // pred_fallthru
          _
        %s189 = sand.u32 %s30, 1
        %s190 = scalar_lea.sflag [#allocation3], %s189
        %s191 = sand.u32 %s30, 1
        %s192 = smul.addr %s191, 128
        %s193 = scalar_lea.vmem [#allocation2], %s192
        %p194 = pneg %p43
        %p195 = pneg %p40
        %p196 = pneg %p64
        %p197 = pneg %p61
        %p198 = pneg %p90
        %p199 = pneg %p87
        %s200 = sand.u32 %s77, 1
        %s201 = scalar_lea.sflag [#allocation4], %s200
        %s202 = sand.u32 %s77, 1
        %s203 = smul.addr %s202, 128
        %s204 = scalar_lea.vmem [#allocation7], %s203
        %p205 = pneg %p116
        %p206 = pneg %p113
        %s207 = smul.u32 16, %s22
        %p208 = scmp.lt.s32.totalorder %s207, 31
        %s209 = scalar_select %p208, %s207, 31
        %s210 = smul.addr %s209, 8
        %s211 = scalar_lea.vmem %s3, %s210
        %s212 = smul.u32 16, %s22
        %s213 = smul.u32 16, %s22
        %s214 = smul.u32 16, %s22
        %p215 = scmp.lt.s32.totalorder %s214, 31
        %s216 = scalar_select %p215, %s214, 31
        %s217 = smul.addr %s216, 8
        %s218 = scalar_lea.vmem %s3, %s217
        %s219 = smul.u32 16, %s22
        %v220 = vld [vmem:[%s180] sm:$0xff]
        %v221 = vld [vmem:[%s180 + $0x8] sm:$0xff]
        %v222 = vld [vmem:[%s180 + $0x10] sm:$0xff]
        %v223 = vld [vmem:[%s180 + $0x18] sm:$0xff]
        %v224 = vld [vmem:[%s180 + $0x20] sm:$0xff]
        %v225 = vld [vmem:[%s180 + $0x28] sm:$0xff]
        %v226 = vld [vmem:[%s180 + $0x30] sm:$0xff]
        %v227 = vld [vmem:[%s180 + $0x38] sm:$0xff]
        %v228 = vld [vmem:[%s180 + $0x40] sm:$0xff]
        %v229 = vld [vmem:[%s180 + $0x48] sm:$0xff]
        %v230 = vld [vmem:[%s180 + $0x50] sm:$0xff]
        %v231 = vld [vmem:[%s180 + $0x58] sm:$0xff]
        %v232 = vld [vmem:[%s180 + $0x60] sm:$0xff]
        %v233 = vld [vmem:[%s180 + $0x68] sm:$0xff]
        %v234 = vld [vmem:[%s180 + $0x70] sm:$0xff]
        %v235 = vld [vmem:[%s180 + $0x78] sm:$0xff]
        %v236 = vld [vmem:[#allocation5] sm:$0xff]
        %v237 = vld [vmem:[#allocation5 + $0x8] sm:$0xff]
        %v238 = vld [vmem:[#allocation5 + $0x10] sm:$0xff]
        %v239 = vld [vmem:[#allocation5 + $0x18] sm:$0xff]
        %v240 = vld [vmem:[#allocation5 + $0x20] sm:$0xff]
        %v241 = vld [vmem:[#allocation5 + $0x28] sm:$0xff]
        %v242 = vld [vmem:[#allocation5 + $0x30] sm:$0xff]
        %v243 = vld [vmem:[#allocation5 + $0x38] sm:$0xff]
        %v244 = vld [vmem:[#allocation5 + $0x40] sm:$0xff]
        %v245 = vld [vmem:[#allocation5 + $0x48] sm:$0xff]
        %v246 = vld [vmem:[#allocation5 + $0x50] sm:$0xff]
        %v247 = vld [vmem:[#allocation5 + $0x58] sm:$0xff]
        %v248 = vld [vmem:[#allocation5 + $0x60] sm:$0xff]
        %v249 = vld [vmem:[#allocation5 + $0x68] sm:$0xff]
        %v250 = vld [vmem:[#allocation5 + $0x70] sm:$0xff]
        %v251 = vld [vmem:[#allocation5 + $0x78] sm:$0xff]
        %v252 = vld [vmem:[#allocation5 + $0x80] sm:$0xff]
        %v253 = vld [vmem:[#allocation5 + $0x88] sm:$0xff]
        %v254 = vld [vmem:[#allocation5 + $0x90] sm:$0xff]
        %v255 = vld [vmem:[#allocation5 + $0x98] sm:$0xff]
        %v256 = vld [vmem:[#allocation5 + $0xa0] sm:$0xff]
        %v257 = vld [vmem:[#allocation5 + $0xa8] sm:$0xff]
        %v258 = vld [vmem:[#allocation5 + $0xb0] sm:$0xff]
        %v259 = vld [vmem:[#allocation5 + $0xb8] sm:$0xff]
        %v260 = vld [vmem:[#allocation5 + $0xc0] sm:$0xff]
        %v261 = vld [vmem:[#allocation5 + $0xc8] sm:$0xff]
        %v262 = vld [vmem:[#allocation5 + $0xd0] sm:$0xff]
        %v263 = vld [vmem:[#allocation5 + $0xd8] sm:$0xff]
        %v264 = vld [vmem:[#allocation5 + $0xe0] sm:$0xff]
        %v265 = vld [vmem:[#allocation5 + $0xe8] sm:$0xff]
        %v266 = vld [vmem:[#allocation5 + $0xf0] sm:$0xff]
        %v267 = vld [vmem:[#allocation5 + $0xf8] sm:$0xff]
        %268 = vmatprep.subr.mxu0 %v237
        %269 = vmatpush1.msra.mxu0 %v236
        %270 = vmatprep.subr.mxu0 %v239
        %271 = vmatpush1.msra.mxu0 %v238
        %272 = vmatprep.subr.mxu0 %v241
        %273 = vmatpush1.msra.mxu0 %v240
        %274 = vmatprep.subr.mxu0 %v243
        %275 = vmatpush1.msra.mxu0 %v242
        %276 = vmatprep.subr.mxu0 %v245
        %277 = vmatpush1.msra.mxu0 %v244
        %278 = vmatprep.subr.mxu0 %v247
        %279 = vmatpush1.msra.mxu0 %v246
        %280 = vmatprep.subr.mxu0 %v249
        %281 = vmatpush1.msra.mxu0 %v248
        %282 = vmatprep.subr.mxu0 %v251
        %283 = vmatpush1.msra.mxu0 %v250
        %284 = vmatprep.subr.mxu0 %v253
        %285 = vmatpush1.msra.mxu0 %v252
        %286 = vmatprep.subr.mxu0 %v255
        %287 = vmatpush1.msra.mxu0 %v254
        %288 = vmatprep.subr.mxu0 %v257
        %289 = vmatpush1.msra.mxu0 %v256
        %290 = vmatprep.subr.mxu0 %v259
        %291 = vmatpush1.msra.mxu0 %v258
        %292 = vmatprep.subr.mxu0 %v261
        %293 = vmatpush1.msra.mxu0 %v260
        %294 = vmatprep.subr.mxu0 %v263
        %295 = vmatpush1.msra.mxu0 %v262
        %296 = vmatprep.subr.mxu0 %v265
        %297 = vmatpush1.msra.mxu0 %v264
        %298 = vmatprep.subr.mxu0 %v267
        %299 = vmatpush1.msra.mxu0 %v266
        %300 = vmatprep.subr.mxu0 0.0
        %301 = vmatpush1.msra.mxu0 0.0
        %302 = vmatprep.subr.mxu0 0.0
        %303 = vmatpush1.msra.mxu0 0.0
        %304 = vmatprep.subr.mxu0 0.0
        %305 = vmatpush1.msra.mxu0 0.0
        %306 = vmatprep.subr.mxu0 0.0
        %307 = vmatpush1.msra.mxu0 0.0
        %308 = vmatprep.subr.mxu0 0.0
        %309 = vmatpush1.msra.mxu0 0.0
        %310 = vmatprep.subr.mxu0 0.0
        %311 = vmatpush1.msra.mxu0 0.0
        %312 = vmatprep.subr.mxu0 0.0
        %313 = vmatpush1.msra.mxu0 0.0
        %314 = vmatprep.subr.mxu0 0.0
        %315 = vmatpush1.msra.mxu0 0.0
        %316 = vmatprep.subr.mxu0 0.0
        %317 = vmatpush1.msra.mxu0 0.0
        %318 = vmatprep.subr.mxu0 0.0
        %319 = vmatpush1.msra.mxu0 0.0
        %320 = vmatprep.subr.mxu0 0.0
        %321 = vmatpush1.msra.mxu0 0.0
        %322 = vmatprep.subr.mxu0 0.0
        %323 = vmatpush1.msra.mxu0 0.0
        %324 = vmatprep.subr.mxu0 0.0
        %325 = vmatpush1.msra.mxu0 0.0
        %326 = vmatprep.subr.mxu0 0.0
        %327 = vmatpush1.msra.mxu0 0.0
        %328 = vmatprep.subr.mxu0 0.0
        %329 = vmatpush1.msra.mxu0 0.0
        %330 = vmatprep.subr.mxu0 0.0
        %331 = vmatpush1.msra.mxu0 0.0
        %332 = vmatprep.mubr.f32.mxu0 0.0
        %333 = vmatmul.mubr.f32.gmra.mrb[0].mxu0 %v220
        %v334 = vpop.f32.mrb[0].mxu0
        %v335 = vadd.f32 0.0, %v334
        %v336 = vpop.f32.mrb[0].mxu0
        %v337 = vadd.f32 0.0, %v336
        %338 = vmatprep.mubr.f32.mxu0 0.0
        %339 = vmatmul.mubr.f32.gmra.mrb[0].mxu0 %v221
        %v340 = vpop.f32.mrb[0].mxu0
        %v341 = vadd.f32 0.0, %v340
        %v342 = vpop.f32.mrb[0].mxu0
        %v343 = vadd.f32 0.0, %v342
        %344 = vmatprep.mubr.f32.mxu0 0.0
        %345 = vmatmul.mubr.f32.gmra.mrb[0].mxu0 %v222
        %v346 = vpop.f32.mrb[0].mxu0
        %v347 = vadd.f32 0.0, %v346
        %v348 = vpop.f32.mrb[0].mxu0
        %v349 = vadd.f32 0.0, %v348
        %350 = vmatprep.mubr.f32.mxu0 0.0
        %351 = vmatmul.mubr.f32.gmra.mrb[0].mxu0 %v223
        %v352 = vpop.f32.mrb[0].mxu0
        %v353 = vadd.f32 0.0, %v352
        %v354 = vpop.f32.mrb[0].mxu0
        %v355 = vadd.f32 0.0, %v354
        %356 = vmatprep.mubr.f32.mxu0 0.0
        %357 = vmatmul.mubr.f32.gmra.mrb[0].mxu0 %v224
        %v358 = vpop.f32.mrb[0].mxu0
        %v359 = vadd.f32 0.0, %v358
        %v360 = vpop.f32.mrb[0].mxu0
        %v361 = vadd.f32 0.0, %v360
        %362 = vmatprep.mubr.f32.mxu0 0.0
        %363 = vmatmul.mubr.f32.gmra.mrb[0].mxu0 %v225
        %v364 = vpop.f32.mrb[0].mxu0
        %v365 = vadd.f32 0.0, %v364
        %v366 = vpop.f32.mrb[0].mxu0
        %v367 = vadd.f32 0.0, %v366
        %368 = vmatprep.mubr.f32.mxu0 0.0
        %369 = vmatmul.mubr.f32.gmra.mrb[0].mxu0 %v226
        %v370 = vpop.f32.mrb[0].mxu0
        %v371 = vadd.f32 0.0, %v370
        %v372 = vpop.f32.mrb[0].mxu0
        %v373 = vadd.f32 0.0, %v372
        %374 = vmatprep.mubr.f32.mxu0 0.0
        %375 = vmatmul.mubr.f32.gmra.mrb[0].mxu0 %v227
        %v376 = vpop.f32.mrb[0].mxu0
        %v377 = vadd.f32 0.0, %v376
        %v378 = vpop.f32.mrb[0].mxu0
        %v379 = vadd.f32 0.0, %v378
        %380 = vmatprep.mubr.f32.mxu0 0.0
        %381 = vmatmul.mubr.f32.gmra.mrb[0].mxu0 %v228
        %v382 = vpop.f32.mrb[0].mxu0
        %v383 = vadd.f32 0.0, %v382
        %v384 = vpop.f32.mrb[0].mxu0
        %v385 = vadd.f32 0.0, %v384
        %386 = vmatprep.mubr.f32.mxu0 0.0
        %387 = vmatmul.mubr.f32.gmra.mrb[0].mxu0 %v229
        %v388 = vpop.f32.mrb[0].mxu0
        %v389 = vadd.f32 0.0, %v388
        %v390 = vpop.f32.mrb[0].mxu0
        %v391 = vadd.f32 0.0, %v390
        %392 = vmatprep.mubr.f32.mxu0 0.0
        %393 = vmatmul.mubr.f32.gmra.mrb[0].mxu0 %v230
        %v394 = vpop.f32.mrb[0].mxu0
        %v395 = vadd.f32 0.0, %v394
        %v396 = vpop.f32.mrb[0].mxu0
        %v397 = vadd.f32 0.0, %v396
        %398 = vmatprep.mubr.f32.mxu0 0.0
        %399 = vmatmul.mubr.f32.gmra.mrb[0].mxu0 %v231
        %v400 = vpop.f32.mrb[0].mxu0
        %v401 = vadd.f32 0.0, %v400
        %v402 = vpop.f32.mrb[0].mxu0
        %v403 = vadd.f32 0.0, %v402
        %404 = vmatprep.mubr.f32.mxu0 0.0
        %405 = vmatmul.mubr.f32.gmra.mrb[0].mxu0 %v232
        %v406 = vpop.f32.mrb[0].mxu0
        %v407 = vadd.f32 0.0, %v406
        %v408 = vpop.f32.mrb[0].mxu0
        %v409 = vadd.f32 0.0, %v408
        %410 = vmatprep.mubr.f32.mxu0 0.0
        %411 = vmatmul.mubr.f32.gmra.mrb[0].mxu0 %v233
        %v412 = vpop.f32.mrb[0].mxu0
        %v413 = vadd.f32 0.0, %v412
        %v414 = vpop.f32.mrb[0].mxu0
        %v415 = vadd.f32 0.0, %v414
        %416 = vmatprep.mubr.f32.mxu0 0.0
        %417 = vmatmul.mubr.f32.gmra.mrb[0].mxu0 %v234
        %v418 = vpop.f32.mrb[0].mxu0
        %v419 = vadd.f32 0.0, %v418
        %v420 = vpop.f32.mrb[0].mxu0
        %v421 = vadd.f32 0.0, %v420
        %422 = vmatprep.mubr.f32.mxu0 0.0
        %423 = vmatmul.mubr.f32.gmra.mrb[0].mxu0 %v235
        %v424 = vpop.f32.mrb[0].mxu0
        %v425 = vadd.f32 0.0, %v424
        %v426 = vpop.f32.mrb[0].mxu0
        %v427 = vadd.f32 0.0, %v426
        %428 = vdwg.mxu0
        %vm429 = vcmp.gt.f32.partialorder %v335, 0.0
        %vm430 = vcmp.gt.f32.partialorder %v337, 0.0
        %vm431 = vcmp.gt.f32.partialorder %v341, 0.0
        %vm432 = vcmp.gt.f32.partialorder %v343, 0.0
        %vm433 = vcmp.gt.f32.partialorder %v347, 0.0
        %vm434 = vcmp.gt.f32.partialorder %v349, 0.0
        %vm435 = vcmp.gt.f32.partialorder %v353, 0.0
        %vm436 = vcmp.gt.f32.partialorder %v355, 0.0
        %vm437 = vcmp.gt.f32.partialorder %v359, 0.0
        %vm438 = vcmp.gt.f32.partialorder %v361, 0.0
        %vm439 = vcmp.gt.f32.partialorder %v365, 0.0
        %vm440 = vcmp.gt.f32.partialorder %v367, 0.0
        %vm441 = vcmp.gt.f32.partialorder %v371, 0.0
        %vm442 = vcmp.gt.f32.partialorder %v373, 0.0
        %vm443 = vcmp.gt.f32.partialorder %v377, 0.0
        %vm444 = vcmp.gt.f32.partialorder %v379, 0.0
        %vm445 = vcmp.gt.f32.partialorder %v383, 0.0
        %vm446 = vcmp.gt.f32.partialorder %v385, 0.0
        %vm447 = vcmp.gt.f32.partialorder %v389, 0.0
        %vm448 = vcmp.gt.f32.partialorder %v391, 0.0
        %vm449 = vcmp.gt.f32.partialorder %v395, 0.0
        %vm450 = vcmp.gt.f32.partialorder %v397, 0.0
        %vm451 = vcmp.gt.f32.partialorder %v401, 0.0
        %vm452 = vcmp.gt.f32.partialorder %v403, 0.0
        %vm453 = vcmp.gt.f32.partialorder %v407, 0.0
        %vm454 = vcmp.gt.f32.partialorder %v409, 0.0
        %vm455 = vcmp.gt.f32.partialorder %v413, 0.0
        %vm456 = vcmp.gt.f32.partialorder %v415, 0.0
        %vm457 = vcmp.gt.f32.partialorder %v419, 0.0
        %vm458 = vcmp.gt.f32.partialorder %v421, 0.0
        %vm459 = vcmp.gt.f32.partialorder %v425, 0.0
        %vm460 = vcmp.gt.f32.partialorder %v427, 0.0
        %v461 = vsel %vm429, 1, 0
        %v462 = vsel %vm430, 1, 0
        %v463 = vsel %vm431, 1, 0
        %v464 = vsel %vm432, 1, 0
        %v465 = vsel %vm433, 1, 0
        %v466 = vsel %vm434, 1, 0
        %v467 = vsel %vm435, 1, 0
        %v468 = vsel %vm436, 1, 0
        %v469 = vsel %vm437, 1, 0
        %v470 = vsel %vm438, 1, 0
        %v471 = vsel %vm439, 1, 0
        %v472 = vsel %vm440, 1, 0
        %v473 = vsel %vm441, 1, 0
        %v474 = vsel %vm442, 1, 0
        %v475 = vsel %vm443, 1, 0
        %v476 = vsel %vm444, 1, 0
        %v477 = vsel %vm445, 1, 0
        %v478 = vsel %vm446, 1, 0
        %v479 = vsel %vm447, 1, 0
        %v480 = vsel %vm448, 1, 0
        %v481 = vsel %vm449, 1, 0
        %v482 = vsel %vm450, 1, 0
        %v483 = vsel %vm451, 1, 0
        %v484 = vsel %vm452, 1, 0
        %v485 = vsel %vm453, 1, 0
        %v486 = vsel %vm454, 1, 0
        %v487 = vsel %vm455, 1, 0
        %v488 = vsel %vm456, 1, 0
        %v489 = vsel %vm457, 1, 0
        %v490 = vsel %vm458, 1, 0
        %v491 = vsel %vm459, 1, 0
        %v492 = vsel %vm460, 1, 0
        %v493 = vcvt.s32.f32 %v461
        %v494 = vcvt.s32.f32 %v462
        %v495 = vcvt.s32.f32 %v463
        %v496 = vcvt.s32.f32 %v464
        %v497 = vcvt.s32.f32 %v465
        %v498 = vcvt.s32.f32 %v466
        %v499 = vcvt.s32.f32 %v467
        %v500 = vcvt.s32.f32 %v468
        %v501 = vcvt.s32.f32 %v469
        %v502 = vcvt.s32.f32 %v470
        %v503 = vcvt.s32.f32 %v471
        %v504 = vcvt.s32.f32 %v472
        %v505 = vcvt.s32.f32 %v473
        %v506 = vcvt.s32.f32 %v474
        %v507 = vcvt.s32.f32 %v475
        %v508 = vcvt.s32.f32 %v476
        %v509 = vcvt.s32.f32 %v477
        %v510 = vcvt.s32.f32 %v478
        %v511 = vcvt.s32.f32 %v479
        %v512 = vcvt.s32.f32 %v480
        %v513 = vcvt.s32.f32 %v481
        %v514 = vcvt.s32.f32 %v482
        %v515 = vcvt.s32.f32 %v483
        %v516 = vcvt.s32.f32 %v484
        %v517 = vcvt.s32.f32 %v485
        %v518 = vcvt.s32.f32 %v486
        %v519 = vcvt.s32.f32 %v487
        %v520 = vcvt.s32.f32 %v488
        %v521 = vcvt.s32.f32 %v489
        %v522 = vcvt.s32.f32 %v490
        %v523 = vcvt.s32.f32 %v491
        %v524 = vcvt.s32.f32 %v492
        %v525 = vpack.c.bf16 %v495, %v493
        %v526 = vpack.c.bf16 %v496, %v494
        %v527 = vpack.c.bf16 %v499, %v497
        %v528 = vpack.c.bf16 %v500, %v498
        %v529 = vpack.c.bf16 %v503, %v501
        %v530 = vpack.c.bf16 %v504, %v502
        %v531 = vpack.c.bf16 %v507, %v505
        %v532 = vpack.c.bf16 %v508, %v506
        %v533 = vpack.c.bf16 %v511, %v509
        %v534 = vpack.c.bf16 %v512, %v510
        %v535 = vpack.c.bf16 %v515, %v513
        %v536 = vpack.c.bf16 %v516, %v514
        %v537 = vpack.c.bf16 %v519, %v517
        %v538 = vpack.c.bf16 %v520, %v518
        %v539 = vpack.c.bf16 %v523, %v521
        %v540 = vpack.c.bf16 %v524, %v522
        %v557 = vunpack.c.l.b16 %v525
        %v558 = vunpack.c.l.b16 %v526
        %v559 = vunpack.c.h.b16 %v525
        %v560 = vunpack.c.h.b16 %v526
        %v561 = vunpack.c.l.b16 %v527
        %v562 = vunpack.c.l.b16 %v528
        %v563 = vunpack.c.h.b16 %v527
        %v564 = vunpack.c.h.b16 %v528
        %v565 = vunpack.c.l.b16 %v529
        %v566 = vunpack.c.l.b16 %v530
        %v567 = vunpack.c.h.b16 %v529
        %v568 = vunpack.c.h.b16 %v530
        %v569 = vunpack.c.l.b16 %v531
        %v570 = vunpack.c.l.b16 %v532
        %v571 = vunpack.c.h.b16 %v531
        %v572 = vunpack.c.h.b16 %v532
        %v573 = vunpack.c.l.b16 %v533
        %v574 = vunpack.c.l.b16 %v534
        %v575 = vunpack.c.h.b16 %v533
        %v576 = vunpack.c.h.b16 %v534
        %v577 = vunpack.c.l.b16 %v535
        %v578 = vunpack.c.l.b16 %v536
        %v579 = vunpack.c.h.b16 %v535
        %v580 = vunpack.c.h.b16 %v536
        %v581 = vunpack.c.l.b16 %v537
        %v582 = vunpack.c.l.b16 %v538
        %v583 = vunpack.c.h.b16 %v537
        %v584 = vunpack.c.h.b16 %v538
        %v585 = vunpack.c.l.b16 %v539
        %v586 = vunpack.c.l.b16 %v540
        %v587 = vunpack.c.h.b16 %v539
        %v588 = vunpack.c.h.b16 %v540
        %v589 = vpack.c.b16 %v558, %v557
        %v590 = vpack.c.b16 %v560, %v559
        %v591 = vpack.c.b16 %v562, %v561
        %v592 = vpack.c.b16 %v564, %v563
        %v593 = vpack.c.b16 %v566, %v565
        %v594 = vpack.c.b16 %v568, %v567
        %v595 = vpack.c.b16 %v570, %v569
        %v596 = vpack.c.b16 %v572, %v571
        %v597 = vpack.c.b16 %v574, %v573
        %v598 = vpack.c.b16 %v576, %v575
        %v599 = vpack.c.b16 %v578, %v577
        %v600 = vpack.c.b16 %v580, %v579
        %v601 = vpack.c.b16 %v582, %v581
        %v602 = vpack.c.b16 %v584, %v583
        %v603 = vpack.c.b16 %v586, %v585
        %v604 = vpack.c.b16 %v588, %v587
        %621 = vst [vmem:[%s204] sm:$0xff] %v589
        %622 = vst [vmem:[%s204 + $0x8] sm:$0xff] %v590
        %623 = vst [vmem:[%s204 + $0x10] sm:$0xff] %v591
        %624 = vst [vmem:[%s204 + $0x18] sm:$0xff] %v592
        %625 = vst [vmem:[%s204 + $0x20] sm:$0xff] %v593
        %626 = vst [vmem:[%s204 + $0x28] sm:$0xff] %v594
        %627 = vst [vmem:[%s204 + $0x30] sm:$0xff] %v595
        %628 = vst [vmem:[%s204 + $0x38] sm:$0xff] %v596
        %629 = vst [vmem:[%s204 + $0x40] sm:$0xff] %v597
        %630 = vst [vmem:[%s204 + $0x48] sm:$0xff] %v598
        %631 = vst [vmem:[%s204 + $0x50] sm:$0xff] %v599
        %632 = vst [vmem:[%s204 + $0x58] sm:$0xff] %v600
        %633 = vst [vmem:[%s204 + $0x60] sm:$0xff] %v601
        %634 = vst [vmem:[%s204 + $0x68] sm:$0xff] %v602
        %635 = vst [vmem:[%s204 + $0x70] sm:$0xff] %v603
        %636 = vst [vmem:[%s204 + $0x78] sm:$0xff] %v604
        %v637 = vadd.f32 %v493, %v494
        %638 = vadd.xlane.f32.xlu0 %v637
        %v639 = vpop.xlane.xlu0 %638
        %v640 = vadd.f32 %v495, %v496
        %641 = vadd.xlane.f32.xlu0 %v640
        %v642 = vpop.xlane.xlu0 %641
        %v643 = vadd.f32 %v497, %v498
        %644 = vadd.xlane.f32.xlu0 %v643
        %v645 = vpop.xlane.xlu0 %644
        %v646 = vadd.f32 %v499, %v500
        %647 = vadd.xlane.f32.xlu0 %v646
        %v648 = vpop.xlane.xlu0 %647
        %v649 = vadd.f32 %v501, %v502
        %650 = vadd.xlane.f32.xlu0 %v649
        %v651 = vpop.xlane.xlu0 %650
        %v652 = vadd.f32 %v503, %v504
        %653 = vadd.xlane.f32.xlu0 %v652
        %v654 = vpop.xlane.xlu0 %653
        %v655 = vadd.f32 %v505, %v506
        %656 = vadd.xlane.f32.xlu0 %v655
        %v657 = vpop.xlane.xlu0 %656
        %v658 = vadd.f32 %v507, %v508
        %659 = vadd.xlane.f32.xlu0 %v658
        %v660 = vpop.xlane.xlu0 %659
        %v661 = vadd.f32 %v509, %v510
        %662 = vadd.xlane.f32.xlu0 %v661
        %v663 = vpop.xlane.xlu0 %662
        %v664 = vadd.f32 %v511, %v512
        %665 = vadd.xlane.f32.xlu0 %v664
        %v666 = vpop.xlane.xlu0 %665
        %v667 = vadd.f32 %v513, %v514
        %668 = vadd.xlane.f32.xlu0 %v667
        %v669 = vpop.xlane.xlu0 %668
        %v670 = vadd.f32 %v515, %v516
        %671 = vadd.xlane.f32.xlu0 %v670
        %v672 = vpop.xlane.xlu0 %671
        %v673 = vadd.f32 %v517, %v518
        %674 = vadd.xlane.f32.xlu0 %v673
        %v675 = vpop.xlane.xlu0 %674
        %v676 = vadd.f32 %v519, %v520
        %677 = vadd.xlane.f32.xlu0 %v676
        %v678 = vpop.xlane.xlu0 %677
        %v679 = vadd.f32 %v521, %v522
        %680 = vadd.xlane.f32.xlu0 %v679
        %v681 = vpop.xlane.xlu0 %680
        %v682 = vadd.f32 %v523, %v524
        %683 = vadd.xlane.f32.xlu0 %v682
        %v684 = vpop.xlane.xlu0 %683
        %vm685 = vcmask 7168
        %686 = vst.msk [vmem:[%s218] sm:$0xff] %vm685, %v639
        %687 = vst.msk [vmem:[%s218 + $0x8] sm:$0xff] %vm685, %v642
        %688 = vst.msk [vmem:[%s218 + $0x10] sm:$0xff] %vm685, %v645
        %689 = vst.msk [vmem:[%s218 + $0x18] sm:$0xff] %vm685, %v648
        %690 = vst.msk [vmem:[%s218 + $0x20] sm:$0xff] %vm685, %v651
        %691 = vst.msk [vmem:[%s218 + $0x28] sm:$0xff] %vm685, %v654
        %692 = vst.msk [vmem:[%s218 + $0x30] sm:$0xff] %vm685, %v657
        %693 = vst.msk [vmem:[%s218 + $0x38] sm:$0xff] %vm685, %v660
        %694 = vst.msk [vmem:[%s218 + $0x40] sm:$0xff] %vm685, %v663
        %695 = vst.msk [vmem:[%s218 + $0x48] sm:$0xff] %vm685, %v666
        %696 = vst.msk [vmem:[%s218 + $0x50] sm:$0xff] %vm685, %v669
        %697 = vst.msk [vmem:[%s218 + $0x58] sm:$0xff] %vm685, %v672
        %698 = vst.msk [vmem:[%s218 + $0x60] sm:$0xff] %vm685, %v675
        %699 = vst.msk [vmem:[%s218 + $0x68] sm:$0xff] %vm685, %v678
        %700 = vst.msk [vmem:[%s218 + $0x70] sm:$0xff] %vm685, %v681
        %701 = vst.msk [vmem:[%s218 + $0x78] sm:$0xff] %vm685, %v684
        %s702 = sand.u32 %s77, 1
        %s703 = scalar_lea.sflag [#allocation4], %s702
        %s704 = sand.u32 %s77, 1
        %s705 = smul.addr %s704, 128
        %s706 = scalar_lea.vmem [#allocation7], %s705
        %s707 = smul.u32 16, %s22
        %p708 = scmp.lt.s32.totalorder %s707, 31
        %s709 = scalar_select %p708, %s707, 31
        %s710 = smul.addr %s709, 8
        %s711 = scalar_lea.vmem %s3, %s710
        // Predicated region
        $region37: #{tpu_custom_call.1} parent=27 // pred_check
          %p712 = pneg %p87
        $region38: #{tpu_custom_call.1} parent=27 // pred_check_branch
          %714 = sbr.rel (%p712) target = $region40
        $region39: #{tpu_custom_call.1} parent=27 // pred_region
          %s715 = smul.u32 16, %s22
          %s717 = ssub.s32 2048, 2048
          %718 = vsyncadd %s703, %s717
          %s719 = smul.addr %s715, 2
          %s720 = smul.addr %s719, 64
          %s721 = scalar_lea.hbm %s2, %s720
          %s722 = sshll.u32 %s706, 4
          %s723 = int_to_ptr.vmem [resolvable:$true] %s722
          %728 = dma.vmem_to_hbm [thread:$0]  %s723, 2048, %s721, %s703, 128, 128, 8
        $region40: #{tpu_custom_call.1} parent=27 // pred_fallthru
          _
        // Predicated region
        $region41: #{tpu_custom_call.1} parent=27 // pred_check
          %p729 = pneg %p113
        $region42: #{tpu_custom_call.1} parent=27 // pred_check_branch
          %731 = sbr.rel (%p729) target = $region44
        $region43: #{tpu_custom_call.1} parent=27 // pred_region
          %s732 = smul.u32 16, %s22
        $region44: #{tpu_custom_call.1} parent=27 // pred_fallthru
          _
      $region28: #{tpu_custom_call.1} parent=5 // pred_fallthru
        _
      %p733 = scmp.le.s32.totalorder 2, %s17
      // Predicated region
      $region45: #{tpu_custom_call.1} parent=5 // pred_check
        %p734 = pneg %p733
      $region46: #{tpu_custom_call.1} parent=5 // pred_check_branch
        %736 = sbr.rel (%p734) target = $region48
      $region47: #{tpu_custom_call.1} parent=5 // pred_region
        %s737 = ssub.s32 %s17, 2
        // Predicated region
        $region49: #{tpu_custom_call.1} parent=47 // pred_check
          %p738 = pneg %p93
        $region50: #{tpu_custom_call.1} parent=47 // pred_check_branch
          %740 = sbr.rel (%p738) target = $region52
        $region51: #{tpu_custom_call.1} parent=47 // pred_region
          %s741 = sand.u32 %s78, 1
          %s742 = scalar_lea.sflag [#allocation4], %s741
          %s743 = sand.u32 %s78, 1
          %s744 = smul.addr %s743, 128
          %s745 = scalar_lea.vmem [#allocation7], %s744
          %746 = dma.done %s742, 2048
        $region52: #{tpu_custom_call.1} parent=47 // pred_fallthru
          _
        // Predicated region
        $region53: #{tpu_custom_call.1} parent=47 // pred_check
          %p747 = pneg %p119
        $region54: #{tpu_custom_call.1} parent=47 // pred_check_branch
          %749 = sbr.rel (%p747) target = $region56
        $region55: #{tpu_custom_call.1} parent=47 // pred_region
          %s750 = smul.u32 16, %s23
          %p751 = scmp.lt.s32.totalorder %s750, 31
          %s752 = scalar_select %p751, %s750, 31
          %s753 = smul.addr %s752, 8
          %s754 = scalar_lea.vmem %s3, %s753
        $region56: #{tpu_custom_call.1} parent=47 // pred_fallthru
          _
      $region48: #{tpu_custom_call.1} parent=5 // pred_fallthru
        _
    $region6: #{tpu_custom_call.1} parent=1 // loop_footer
      %s21 = sadd.s32 1, %s17
    $region7: #{tpu_custom_call.1} parent=1 // loop_footer_branch
      %16 = sbr.rel target = $region3
    $region8: #{tpu_custom_call.1} parent=1 // loop_exit
      _
    %755 = vsyncpa [#allocation3], 1
    %s756 = scalar_lea.sflag [#allocation3], 1
    %757 = vsyncpa %s756, 1
    %758 = vsyncpa [#allocation6], 1
    %759 = vsyncpa [#allocation4], 1
    %s760 = scalar_lea.sflag [#allocation4], 1
    %761 = vsyncpa %s760, 1

</llo_original>
